<compile_context>
chip_gen: v5e
topology: v5e:2x2
jax: 0.10.0
libtpu: 0.0.40
codegen_flags: <defaults>
</compile_context>

<pallas_src>
import functools

import jax
import jax.numpy as jnp
from jax.experimental import pallas as pl
from jax.experimental.pallas import tpu as pltpu


def _round_up(x, m):
    return (x + m - 1) // m * m


def _cdiv(a, b):
    return (a + b - 1) // b


# --------------------------- parameter slab layout ---------------------------
#
# wpack (f32, (total_rows, P*E)) — matrix operands, row offsets 8-aligned:
#   off_w1 : block-diagonal Linear1 weight  (P*E , P*M1)   (BN folded)
#   off_w2 : block-diagonal Linear2 weight  (P*M1, P*M2)   (BN folded)
#   off_m  : segment sum + broadcast matrix (P*E , P*E)    m[j,k] = (j//E == k//E)
#   off_sx : segment selector over E lanes  (P*E , P)      sx[j,p] = (j//E == p)
#   off_sh : segment selector over M2 lanes (P*M2, P)      sh[j,p] = (j//M2 == p)
#
# vpack (f32, (5 + 2L, P*E)) — row vectors, each tiled P times along lanes:
#   row 0: b1'  row 1: b2'  row 2: cwh  row 3: cwx  row 4: cbias (first P lanes)
#   rows 5..5+L-1: cross weights   rows 5+L..5+2L-1: cross biases

def _wpack_layout(E, M1, M2, P):
    PE, PM1, PM2 = P * E, P * M1, P * M2
    off_w1 = 0
    off_w2 = _round_up(off_w1 + PE, 8)
    off_m = _round_up(off_w2 + PM1, 8)
    off_sx = _round_up(off_m + PE, 8)
    off_sh = _round_up(off_sx + PE, 8)
    total = _round_up(off_sh + PM2, 8)
    return off_w1, off_w2, off_m, off_sx, off_sh, total


# ----------------------------- Pallas kernel --------------------------------

def dcn_kernel(xv_ref, prob_ref, wpack_ref, vpack_ref, out_ref, *,
               E, M1, M2, P, cross_layers, layout):
    off_w1, off_w2, off_m, off_sx, off_sh, _ = layout
    PE, PM1, PM2 = P * E, P * M1, P * M2

    # fused arch-softmax gating; upcast bf16 -> f32 once (math in f32 on all chips)
    xe = xv_ref[...].astype(jnp.float32) * prob_ref[...]              # (TR, PE)

    # ---- MLP (BN folded), block-diagonal over the P packed examples ----
    w1 = wpack_ref[off_w1:off_w1 + PE, 0:PM1]                         # (PE , PM1)
    w2 = wpack_ref[off_w2:off_w2 + PM1, 0:PM2]                        # (PM1, PM2)
    b1 = vpack_ref[0:1, 0:PM1]
    b2 = vpack_ref[1:2, 0:PM2]
    h = jnp.maximum(jnp.dot(xe, w1, preferred_element_type=jnp.float32) + b1, 0.0)
    h = jnp.maximum(jnp.dot(h, w2, preferred_element_type=jnp.float32) + b2, 0.0)

    # dnn partial score right away (frees the hidden slab before the cross loop)
    cwh = vpack_ref[2:3, 0:PM2]
    sh = wpack_ref[off_sh:off_sh + PM2, 0:P]                          # (PM2, P)
    score = jnp.dot(h * cwh, sh, preferred_element_type=jnp.float32)  # (TR, P)

    # ---- CrossNetwork: x_{k+1} = x0 * (x_k . w_k) + b_k + x_k (per example) ----
    mseg = wpack_ref[off_m:off_m + PE, :]                             # (PE, PE)
    x0 = xe
    xc = xe
    for i in range(cross_layers):                                     # static unroll
        w_i = vpack_ref[5 + i:6 + i, :]                               # (1, PE)
        b_i = vpack_ref[5 + cross_layers + i:6 + cross_layers + i, :]
        # per-example <xc, w> broadcast back over that example's E lanes (idle MXU)
        xw = jnp.dot(xc * w_i, mseg, preferred_element_type=jnp.float32)
        xc = x0 * xw + b_i + xc

    # ---- combine: Linear(cat([dnn, cross], 1), 1) via segment matmuls ----
    cwx = vpack_ref[3:4, :]
    sx = wpack_ref[off_sx:off_sx + PE, 0:P]                           # (PE, P)
    score = score + jnp.dot(xc * cwx, sx, preferred_element_type=jnp.float32)
    score = score + vpack_ref[4:5, 0:P]                               # combine bias
    out_ref[...] = score                                              # (TR, P)


# ------------------------ host-side parameter packing ------------------------

def pack_params(params, P, bn_eps=1e-5):
    """Fold eval-mode BN into the Linears; build P-way packed parameter slabs."""
    E, M1 = params["w1"].shape
    M2 = params["w2"].shape[1]
    L = params["cw"].shape[0]
    PE, PM1, PM2 = P * E, P * M1, P * M2
    off_w1, off_w2, off_m, off_sx, off_sh, total = _wpack_layout(E, M1, M2, P)

    s1 = params["g1"] * jax.lax.rsqrt(params["v1"] + bn_eps)          # (1, M1)
    w1p = params["w1"] * s1
    b1p = (params["b1"] - params["m1"]) * s1 + params["bt1"]
    s2 = params["g2"] * jax.lax.rsqrt(params["v2"] + bn_eps)          # (1, M2)
    w2p = params["w2"] * s2
    b2p = (params["b2"] - params["m2"]) * s2 + params["bt2"]

    eye = jnp.eye(P, dtype=jnp.float32)
    w1_bd = jnp.kron(eye, w1p.astype(jnp.float32))                    # (PE , PM1)
    w2_bd = jnp.kron(eye, w2p.astype(jnp.float32))                    # (PM1, PM2)

    seg_x = jnp.arange(PE) // E
    seg_h = jnp.arange(PM2) // M2
    pid = jnp.arange(P)
    mseg = (seg_x[:, None] == seg_x[None, :]).astype(jnp.float32)     # (PE, PE)
    sx = (seg_x[:, None] == pid[None, :]).astype(jnp.float32)         # (PE, P)
    sh = (seg_h[:, None] == pid[None, :]).astype(jnp.float32)         # (PM2, P)

    wpack = jnp.zeros((total, PE), jnp.float32)
    wpack = wpack.at[off_w1:off_w1 + PE, 0:PM1].set(w1_bd)
    wpack = wpack.at[off_w2:off_w2 + PM1, 0:PM2].set(w2_bd)
    wpack = wpack.at[off_m:off_m + PE, 0:PE].set(mseg)
    wpack = wpack.at[off_sx:off_sx + PE, 0:P].set(sx)
    wpack = wpack.at[off_sh:off_sh + PM2, 0:P].set(sh)

    def tile_vec(v):
        return jnp.tile(v.reshape(-1).astype(jnp.float32), P)

    vpack = jnp.zeros((5 + 2 * L, PE), jnp.float32)
    vpack = vpack.at[0, 0:PM1].set(tile_vec(b1p))
    vpack = vpack.at[1, 0:PM2].set(tile_vec(b2p))
    vpack = vpack.at[2, 0:PM2].set(tile_vec(params["cwh"][:, 0]))
    vpack = vpack.at[3, 0:PE].set(tile_vec(params["cwx"][:, 0]))
    vpack = vpack.at[4, 0:P].set(params["cbias"][0, 0])
    for i in range(L):
        vpack = vpack.at[5 + i, 0:PE].set(tile_vec(params["cw"][i, 0]))
        vpack = vpack.at[5 + L + i, 0:PE].set(tile_vec(params["cb"][i, 0]))
    return wpack, vpack


# ----------------------------- pallas_call wrapper ---------------------------

def dcn_pallas_call(xv_flat, prob_tiled, wpack, vpack, *, E, M1, M2, P,
                    cross_layers, max_tile_rows=2048):
    B = xv_flat.shape[0]
    PE = P * E
    layout = _wpack_layout(E, M1, M2, P)

    # ---- padding-aware tile choice (balanced tiles; avoid ~2x pad waste) ----
    rows = _cdiv(B, P)                          # packed rows of P examples
    num_tiles = _cdiv(rows, max_tile_rows)
    if num_tiles == 1 and rows >= 512:          # keep both v7x TensorCores busy
        num_tiles = 2
    tile_rows = _round_up(_cdiv(rows, num_tiles), 16)   # 16: bf16 sublane packing
    rows_pad = tile_rows * num_tiles
    b_pad = rows_pad * P
    if b_pad != B:
        xv_flat = jnp.pad(xv_flat, ((0, b_pad - B), (0, 0)))
    xv_packed = xv_flat.reshape(rows_pad, PE)   # contiguous, zero-copy reshape

    kernel = functools.partial(dcn_kernel, E=E, M1=M1, M2=M2, P=P,
                               cross_layers=cross_layers, layout=layout)

    out = pl.pallas_call(
        kernel,
        grid=(num_tiles,),
        in_specs=[
            pl.BlockSpec((tile_rows, PE), lambda i: (i, 0)),   # packed activations (batch-tiled)
            pl.BlockSpec((1, PE), lambda i: (0, 0)),           # arch prob (resident)
            pl.BlockSpec(wpack.shape, lambda i: (0, 0)),       # matrix slab (resident)
            pl.BlockSpec(vpack.shape, lambda i: (0, 0)),       # vector slab (resident)
        ],
        out_specs=pl.BlockSpec((tile_rows, P), lambda i: (i, 0)),
        out_shape=jax.ShapeDtypeStruct((rows_pad, P), jnp.float32),
        compiler_params=pltpu.CompilerParams(
            dimension_semantics=("parallel",),                 # megacore sharding on v7x
            vmem_limit_bytes=32 * 1024 * 1024),
    )(xv_packed, prob_tiled, wpack, vpack)
    return out.reshape(-1)[:B]                                 # undo packing + squeeze(1)


# ----------------------------- JAX wrapper -----------------------------------

def dcn_search_forward(x_idx, params, beta, arch, cross_layers,
                       act_dtype=jnp.bfloat16):
    """Reproduces DCN_search.forward(x, beta, arch) (inference mode)."""
    prob = jax.nn.softmax(arch / beta, axis=0)                     # (F,)
    D = params["embedding"].shape[1]
    # Cast the table *before* the XLA gather so the dominant (B, E) activation
    # stream materialises directly in bf16 (half the HBM traffic on v6e/v7x).
    # TODO(synk): in-kernel gather is not worthwhile at D=8 (32 B rows would be
    # DMA-descriptor bound), so the embedding lookup stays in XLA.
    emb = params["embedding"].astype(act_dtype)
    xv = emb[x_idx]                                                # (B, F, D)
    B, F, _ = xv.shape
    E = F * D
    xv_flat = xv.reshape(B, E)                                     # contiguous, free

    # lane-packing factor: P consecutive examples per 128-lane vector row
    P = 128 // E if (E <= 128 and 128 % E == 0) else 1

    prob_vec = jnp.repeat(prob, D)                                 # (E,)
    prob_tiled = jnp.tile(prob_vec, P).reshape(1, P * E).astype(jnp.float32)

    wpack, vpack = pack_params(params, P)
    M1 = params["w1"].shape[1]
    M2 = params["w2"].shape[1]
    return dcn_pallas_call(xv_flat, prob_tiled, wpack, vpack,
                           E=E, M1=M1, M2=M2, P=P, cross_layers=cross_layers)


# ----------------------------- pure-JAX reference ----------------------------

def dcn_reference(xv_flat, prob_vec, params, cross_layers, bn_eps=1e-5):
    xe = xv_flat * prob_vec[None, :]

    def bn(h, g, bt, m, v):
        return (h - m) * jax.lax.rsqrt(v + bn_eps) * g + bt

    h = xe @ params["w1"] + params["b1"]
    h = jnp.maximum(bn(h, params["g1"], params["bt1"], params["m1"], params["v1"]), 0.0)
    h = h @ params["w2"] + params["b2"]
    h = jnp.maximum(bn(h, params["g2"], params["bt2"], params["m2"], params["v2"]), 0.0)

    x0 = xe
    xc = xe
    for i in range(cross_layers):
        xw = xc @ params["cw"][i, 0, :][:, None]                   # (B, 1)
        xc = x0 * xw + params["cb"][i, 0, :][None, :] + xc

    score = h @ params["cwh"] + xc @ params["cwx"] + params["cbias"]
    return score[:, 0]


# ----------------------------- Param init ------------------------------------

def init_params(key, field_dim, latent_dim, mlp_dims, cross_layers):
    field_num = len(field_dim)
    feature_num = sum(field_dim)
    E = field_num * latent_dim
    keys = jax.random.split(key, 16)

    def uni(k, shape, bound):
        return jax.random.uniform(k, shape, jnp.float32, -bound, bound)

    emb_bound = (6.0 / (feature_num + latent_dim)) ** 0.5          # xavier_uniform_
    embedding = uni(keys[0], (feature_num, latent_dim), emb_bound)

    # MLP layer 1: Linear(E, mlp_dims[0]) + BatchNorm1d (eval-mode stats)
    w1 = uni(keys[1], (E, mlp_dims[0]), (1.0 / E) ** 0.5)
    b1 = uni(keys[2], (1, mlp_dims[0]), (1.0 / E) ** 0.5)
    g1 = 1.0 + uni(keys[8], (1, mlp_dims[0]), 0.5)
    bt1 = uni(keys[9], (1, mlp_dims[0]), 0.2)
    m1 = uni(keys[10], (1, mlp_dims[0]), 0.2)
    v1 = 1.0 + uni(keys[11], (1, mlp_dims[0]), 0.5)

    # MLP layer 2: Linear(mlp_dims[0], mlp_dims[1]) + BatchNorm1d
    w2 = uni(keys[3], (mlp_dims[0], mlp_dims[1]), (1.0 / mlp_dims[0]) ** 0.5)
    b2 = uni(keys[4], (1, mlp_dims[1]), (1.0 / mlp_dims[0]) ** 0.5)
    g2 = 1.0 + uni(keys[12], (1, mlp_dims[1]), 0.5)
    bt2 = uni(keys[13], (1, mlp_dims[1]), 0.2)
    m2 = uni(keys[14], (1, mlp_dims[1]), 0.2)
    v2 = 1.0 + uni(keys[15], (1, mlp_dims[1]), 0.5)

    # CrossNetwork: L x [Linear(E, 1, bias=False).weight -> (1, E)], bias zeros(E)
    cw = uni(keys[5], (cross_layers, 1, E), (1.0 / E) ** 0.5)
    cb = jnp.zeros((cross_layers, 1, E), jnp.float32)

    # combine: Linear(mlp_dims[-1] + E, 1); split weight per the cat order
    comb_in = mlp_dims[-1] + E
    comb_w = uni(keys[6], (comb_in, 1), (1.0 / comb_in) ** 0.5)
    cwh = comb_w[:mlp_dims[-1], :]
    cwx = comb_w[mlp_dims[-1]:, :]
    cbias = uni(keys[7], (1, 1), (1.0 / comb_in) ** 0.5)

    return dict(embedding=embedding,
                w1=w1, b1=b1, g1=g1, bt1=bt1, m1=m1, v1=v1,
                w2=w2, b2=b2, g2=g2, bt2=bt2, m2=m2, v2=v2,
                cw=cw, cb=cb, cwh=cwh, cwx=cwx, cbias=cbias)


# ------------------------------- main -----------------------------------------

if __name__ == "__main__":
    # opt: field_dim=[3,4,5,6], latent_dim=8, mlp_dims=(16,8), cross_layer_num=2
    field_dim = [3, 4, 5, 6]
    latent_dim = 8
    mlp_dims = (16, 8)
    cross_layers = 2
    field_num = len(field_dim)
    feature_num = sum(field_dim)
    B = 8

    key = jax.random.PRNGKey(0)
    k_param, k_x, k_arch = jax.random.split(key, 3)

    params = init_params(k_param, field_dim, latent_dim, mlp_dims, cross_layers)

    x_idx = jax.random.randint(k_x, (B, field_num), 0, feature_num, dtype=jnp.int32)
    arch = jax.random.normal(k_arch, (field_num,), dtype=jnp.float32)
    beta = 1.0

    score = dcn_search_forward(x_idx, params, beta, arch, cross_layers)
    score = jax.block_until_ready(score)
    assert score.shape == (B,)

    # Pure-JAX reference on the same bf16-quantised activations (validates lane
    # packing, block-diagonal weights, segment matmuls and BN folding; loose
    # tolerance covers MXU bf16-pass precision).
    prob = jax.nn.softmax(arch / beta, axis=0)
    xv_ref = params["embedding"].astype(jnp.bfloat16)[x_idx].astype(jnp.float32)
    xv_ref = xv_ref.reshape(B, field_num * latent_dim)
    ref = dcn_reference(xv_ref, jnp.repeat(prob, latent_dim), params, cross_layers)
    err = float(jnp.max(jnp.abs(score - ref)))
    assert err < 5e-2, f"kernel vs reference mismatch: max abs err = {err}"
    print("KERNEL_OK")
</pallas_src>

<mosaic_0001>
module attributes {stable_mosaic.version = 11 : i64} {
  func.func @dcn_kernel(%arg0: i32, %arg1: memref<16x128xbf16, #tpu.memory_space<vmem>>, %arg2: memref<1x128xf32, #tpu.memory_space<vmem>>, %arg3: memref<480x128xf32, #tpu.memory_space<vmem>>, %arg4: memref<9x128xf32, #tpu.memory_space<vmem>>, %arg5: memref<16x4xf32, #tpu.memory_space<vmem>>) attributes {dimension_semantics = [#tpu.dimension_semantics<parallel>], iteration_bounds = array<i64: 1>, scalar_prefetch = 0 : i64, scratch_operands = 0 : i64, tpu.core_type = #tpu.core_type<tc>, window_params = [{transform_indices = @transform_0, window_bounds = array<i64: 16, 128>}, {pipeline_mode = #tpu.pipeline_mode<synchronous>, transform_indices = @transform_1, window_bounds = array<i64: 1, 128>}, {pipeline_mode = #tpu.pipeline_mode<synchronous>, transform_indices = @transform_2, window_bounds = array<i64: 480, 128>}, {pipeline_mode = #tpu.pipeline_mode<synchronous>, transform_indices = @transform_3, window_bounds = array<i64: 9, 128>}, {transform_indices = @transform_4, window_bounds = array<i64: 16, 4>}]} {
    %c0 = arith.constant 0 : index
    %c0_0 = arith.constant 0 : index
    %0 = vector.load %arg1[%c0, %c0_0] : memref<16x128xbf16, #tpu.memory_space<vmem>>, vector<16x128xbf16>
    %1 = arith.extf %0 : vector<16x128xbf16> to vector<16x128xf32>
    %c0_1 = arith.constant 0 : index
    %c0_2 = arith.constant 0 : index
    %2 = vector.load %arg2[%c0_1, %c0_2] : memref<1x128xf32, #tpu.memory_space<vmem>>, vector<1x128xf32>
    %3 = vector.broadcast %2 : vector<1x128xf32> to vector<16x128xf32>
    %4 = arith.mulf %1, %3 : vector<16x128xf32>
    %c0_3 = arith.constant 0 : index
    %c0_4 = arith.constant 0 : index
    %5 = vector.load %arg3[%c0_3, %c0_4] : memref<480x128xf32, #tpu.memory_space<vmem>>, vector<128x64xf32>
    %c128 = arith.constant 128 : index
    %c0_5 = arith.constant 0 : index
    %6 = vector.load %arg3[%c128, %c0_5] : memref<480x128xf32, #tpu.memory_space<vmem>>, vector<64x32xf32>
    %c0_6 = arith.constant 0 : index
    %c0_7 = arith.constant 0 : index
    %7 = vector.load %arg4[%c0_6, %c0_7] : memref<9x128xf32, #tpu.memory_space<vmem>>, vector<1x64xf32>
    %c1 = arith.constant 1 : index
    %c0_8 = arith.constant 0 : index
    %8 = vector.load %arg4[%c1, %c0_8] : memref<9x128xf32, #tpu.memory_space<vmem>>, vector<1x32xf32>
    %cst = arith.constant dense<0.000000e+00> : vector<16x64xf32>
    %9 = tpu.matmul %4, %5, %cst {dimension_numbers = #tpu.dot_dimension_numbers<[1], [0], [0], [1], [0, 0, 1, 1], [], []>} : vector<16x128xf32>, vector<128x64xf32>, vector<16x64xf32> -> vector<16x64xf32>
    %10 = vector.broadcast %7 : vector<1x64xf32> to vector<16x64xf32>
    %11 = arith.addf %9, %10 : vector<16x64xf32>
    %cst_9 = arith.constant 0.000000e+00 : f32
    %12 = vector.broadcast %cst_9 : f32 to vector<16x64xf32>
    %13 = arith.maximumf %11, %12 : vector<16x64xf32>
    %cst_10 = arith.constant dense<0.000000e+00> : vector<16x32xf32>
    %14 = tpu.matmul %13, %6, %cst_10 {dimension_numbers = #tpu.dot_dimension_numbers<[1], [0], [0], [1], [0, 0, 1, 1], [], []>} : vector<16x64xf32>, vector<64x32xf32>, vector<16x32xf32> -> vector<16x32xf32>
    %15 = vector.broadcast %8 : vector<1x32xf32> to vector<16x32xf32>
    %16 = arith.addf %14, %15 : vector<16x32xf32>
    %cst_11 = arith.constant 0.000000e+00 : f32
    %17 = vector.broadcast %cst_11 : f32 to vector<16x32xf32>
    %18 = arith.maximumf %16, %17 : vector<16x32xf32>
    %c2 = arith.constant 2 : index
    %c0_12 = arith.constant 0 : index
    %19 = vector.load %arg4[%c2, %c0_12] : memref<9x128xf32, #tpu.memory_space<vmem>>, vector<1x32xf32>
    %c448 = arith.constant 448 : index
    %c0_13 = arith.constant 0 : index
    %20 = vector.load %arg3[%c448, %c0_13] : memref<480x128xf32, #tpu.memory_space<vmem>>, vector<32x4xf32>
    %21 = vector.broadcast %19 : vector<1x32xf32> to vector<16x32xf32>
    %22 = arith.mulf %18, %21 : vector<16x32xf32>
    %cst_14 = arith.constant dense<0.000000e+00> : vector<16x4xf32>
    %23 = tpu.matmul %22, %20, %cst_14 {dimension_numbers = #tpu.dot_dimension_numbers<[1], [0], [0], [1], [0, 0, 1, 1], [], []>} : vector<16x32xf32>, vector<32x4xf32>, vector<16x4xf32> -> vector<16x4xf32>
    %c192 = arith.constant 192 : index
    %c0_15 = arith.constant 0 : index
    %24 = vector.load %arg3[%c192, %c0_15] : memref<480x128xf32, #tpu.memory_space<vmem>>, vector<128x128xf32>
    %c5 = arith.constant 5 : index
    %c0_16 = arith.constant 0 : index
    %25 = vector.load %arg4[%c5, %c0_16] : memref<9x128xf32, #tpu.memory_space<vmem>>, vector<1x128xf32>
    %c7 = arith.constant 7 : index
    %c0_17 = arith.constant 0 : index
    %26 = vector.load %arg4[%c7, %c0_17] : memref<9x128xf32, #tpu.memory_space<vmem>>, vector<1x128xf32>
    %27 = vector.broadcast %25 : vector<1x128xf32> to vector<16x128xf32>
    %28 = arith.mulf %4, %27 : vector<16x128xf32>
    %cst_18 = arith.constant dense<0.000000e+00> : vector<16x128xf32>
    %29 = tpu.matmul %28, %24, %cst_18 {dimension_numbers = #tpu.dot_dimension_numbers<[1], [0], [0], [1], [0, 0, 1, 1], [], []>} : vector<16x128xf32>, vector<128x128xf32>, vector<16x128xf32> -> vector<16x128xf32>
    %30 = arith.mulf %4, %29 : vector<16x128xf32>
    %31 = vector.broadcast %26 : vector<1x128xf32> to vector<16x128xf32>
    %32 = arith.addf %30, %31 : vector<16x128xf32>
    %33 = arith.addf %32, %4 : vector<16x128xf32>
    %c6 = arith.constant 6 : index
    %c0_19 = arith.constant 0 : index
    %34 = vector.load %arg4[%c6, %c0_19] : memref<9x128xf32, #tpu.memory_space<vmem>>, vector<1x128xf32>
    %c8 = arith.constant 8 : index
    %c0_20 = arith.constant 0 : index
    %35 = vector.load %arg4[%c8, %c0_20] : memref<9x128xf32, #tpu.memory_space<vmem>>, vector<1x128xf32>
    %36 = vector.broadcast %34 : vector<1x128xf32> to vector<16x128xf32>
    %37 = arith.mulf %33, %36 : vector<16x128xf32>
    %cst_21 = arith.constant dense<0.000000e+00> : vector<16x128xf32>
    %38 = tpu.matmul %37, %24, %cst_21 {dimension_numbers = #tpu.dot_dimension_numbers<[1], [0], [0], [1], [0, 0, 1, 1], [], []>} : vector<16x128xf32>, vector<128x128xf32>, vector<16x128xf32> -> vector<16x128xf32>
    %39 = arith.mulf %4, %38 : vector<16x128xf32>
    %40 = vector.broadcast %35 : vector<1x128xf32> to vector<16x128xf32>
    %41 = arith.addf %39, %40 : vector<16x128xf32>
    %42 = arith.addf %41, %33 : vector<16x128xf32>
    %c3 = arith.constant 3 : index
    %c0_22 = arith.constant 0 : index
    %43 = vector.load %arg4[%c3, %c0_22] : memref<9x128xf32, #tpu.memory_space<vmem>>, vector<1x128xf32>
    %c320 = arith.constant 320 : index
    %c0_23 = arith.constant 0 : index
    %44 = vector.load %arg3[%c320, %c0_23] : memref<480x128xf32, #tpu.memory_space<vmem>>, vector<128x4xf32>
    %45 = vector.broadcast %43 : vector<1x128xf32> to vector<16x128xf32>
    %46 = arith.mulf %42, %45 : vector<16x128xf32>
    %cst_24 = arith.constant dense<0.000000e+00> : vector<16x4xf32>
    %47 = tpu.matmul %46, %44, %cst_24 {dimension_numbers = #tpu.dot_dimension_numbers<[1], [0], [0], [1], [0, 0, 1, 1], [], []>} : vector<16x128xf32>, vector<128x4xf32>, vector<16x4xf32> -> vector<16x4xf32>
    %48 = arith.addf %23, %47 : vector<16x4xf32>
    %c4 = arith.constant 4 : index
    %c0_25 = arith.constant 0 : index
    %49 = vector.load %arg4[%c4, %c0_25] : memref<9x128xf32, #tpu.memory_space<vmem>>, vector<1x4xf32>
    %50 = vector.broadcast %49 : vector<1x4xf32> to vector<16x4xf32>
    %51 = arith.addf %48, %50 : vector<16x4xf32>
    %c0_26 = arith.constant 0 : index
    %c0_27 = arith.constant 0 : index
    %52 = vector.load %arg5[%c0_26, %c0_27] : memref<16x4xf32, #tpu.memory_space<vmem>>, vector<16x4xf32>
    tpu.vector_store %arg5[%c0_26, %c0_27], %51 {strides = array<i32>} : memref<16x4xf32, #tpu.memory_space<vmem>>, vector<16x4xf32>,
    return
  }
  func.func @transform_0(%arg0: i32) -> (i32, i32) {
    %c0_i32 = arith.constant 0 : i32
    %c0_i32_0 = arith.constant 0 : i32
    return %arg0, %c0_i32 : i32, i32
  }
  func.func @transform_1(%arg0: i32) -> (i32, i32) {
    %c0_i32 = arith.constant 0 : i32
    %c0_i32_0 = arith.constant 0 : i32
    %c0_i32_1 = arith.constant 0 : i32
    return %c0_i32, %c0_i32_0 : i32, i32
  }
  func.func @transform_2(%arg0: i32) -> (i32, i32) {
    %c0_i32 = arith.constant 0 : i32
    %c0_i32_0 = arith.constant 0 : i32
    %c0_i32_1 = arith.constant 0 : i32
    return %c0_i32, %c0_i32_0 : i32, i32
  }
  func.func @transform_3(%arg0: i32) -> (i32, i32) {
    %c0_i32 = arith.constant 0 : i32
    %c0_i32_0 = arith.constant 0 : i32
    %c0_i32_1 = arith.constant 0 : i32
    return %c0_i32, %c0_i32_0 : i32, i32
  }
  func.func @transform_4(%arg0: i32) -> (i32, i32) {
    %c0_i32 = arith.constant 0 : i32
    %c0_i32_0 = arith.constant 0 : i32
    return %arg0, %c0_i32 : i32, i32
  }
}

</mosaic_0001>

<llo_original>
// kernel: tpu_custom_call.1
$region0: #{tpu_custom_call.1}
  #allocation0 [shape = 'u32[]', space=smem, size = 0x4, offset = 0x4, fixed_abs, tag = 'smem constant byte address 0x4 - core index']
  #allocation1 [shape = 'u32[72,128]{1,0:T(1,128)}', space=vmem, size = 0x9000, scoped, tag = 'internal scratch']
  %s0 = inlined_call_operand.hbm [shape: bf16[16,128], index: 0, kind: input, shape index: {}]
  %s1 = inlined_call_operand.hbm [shape: f32[1,128], index: 1, kind: input, shape index: {}]
  %s2 = inlined_call_operand.hbm [shape: f32[480,128], index: 2, kind: input, shape index: {}]
  %s3 = inlined_call_operand.hbm [shape: f32[9,128], index: 3, kind: input, shape index: {}]
  %s4 = inlined_call_operand.vmem [shape: f32[16,4], index: 4, kind: output, shape index: {}]
  %s5 = sld [smem:[#allocation0]]
  $region42: #{tpu_custom_call.1} parent=0
    _
  %s7 = ssub.s32 1, %s5
  %s8 = scalar_select 0, %s7, %s5
  $region1: #{tpu_custom_call.1} parent=0
    #allocation2 [shape = 'u8[4096]{0}', space=vmem, size = 0x1000, scoped, tag = 'input window, operand 0, single buffered']
    #allocation3 [shape = 's32[1]{0}', space=sflag, size = 0x4, scoped, tag = 'scoped memory for tpu_custom_call.1']
    #allocation4 [shape = 'u8[512]{0}', space=vmem, size = 0x400, scoped, tag = 'input window, operand 1, single buffered']
    #allocation5 [shape = 's32[1]{0}', space=sflag, size = 0x4, scoped, tag = 'scoped memory for tpu_custom_call.1']
    #allocation6 [shape = 'u8[245760]{0}', space=vmem, size = 0x3c000, scoped, tag = 'input window, operand 2, single buffered']
    #allocation7 [shape = 'u8[8192]{0}', space=vmem, size = 0x2000, scoped, tag = 'input window, operand 3, single buffered']
    #allocation8 [shape = 's32[1]{0}', space=sflag, size = 0x4, scoped, tag = 'scoped memory for tpu_custom_call.1']
    %9 = vsyncpa [#allocation3], 0
    %10 = vsyncpa [#allocation5], 0
    %11 = vsyncpa [#allocation8], 0
    // Predicated region
    $region2: #{tpu_custom_call.1} parent=1 // pred_check
      _
    $region3: #{tpu_custom_call.1} parent=1 // pred_check_branch
      %13 = sbr.rel (0) target = $region5
    $region4: #{tpu_custom_call.1} parent=1 // pred_region
      %15 = vsyncadd [#allocation3], 0
      %s16 = sshll.u32 %s0, 4
      %s17 = int_to_ptr.hbm [resolvable:$true] %s16
      %s18 = sshll.u32 [#allocation2], 4
      %s19 = int_to_ptr.vmem [resolvable:$true] %s18
      %24 = dma.hbm_to_vmem [thread:$0]  %s17, 128, %s19, [#allocation3], 64, 64, 4
    $region5: #{tpu_custom_call.1} parent=1 // pred_fallthru
      _
    // Predicated region
    $region6: #{tpu_custom_call.1} parent=1 // pred_check
      _
    $region7: #{tpu_custom_call.1} parent=1 // pred_check_branch
      %26 = sbr.rel (0) target = $region9
    $region8: #{tpu_custom_call.1} parent=1 // pred_region
      %28 = vsyncadd [#allocation5], 0
      %s30 = sshll.u32 %s1, 4
      %s31 = int_to_ptr.hbm [resolvable:$true] %s30
      %s32 = sshll.u32 [#allocation4], 4
      %s33 = int_to_ptr.vmem [resolvable:$true] %s32
      %35 = dma.hbm_to_vmem [thread:$0]  %s31, 16, %s33, [#allocation5]
    $region9: #{tpu_custom_call.1} parent=1 // pred_fallthru
      _
    // Predicated region
    $region10: #{tpu_custom_call.1} parent=1 // pred_check
      _
    $region11: #{tpu_custom_call.1} parent=1 // pred_check_branch
      %37 = sbr.rel (0) target = $region13
    $region12: #{tpu_custom_call.1} parent=1 // pred_region
      %39 = vsyncadd [#allocation5], 0
      %s40 = sshll.u32 %s2, 4
      %s41 = int_to_ptr.hbm [resolvable:$true] %s40
      %s42 = sshll.u32 [#allocation6], 4
      %s43 = int_to_ptr.vmem [resolvable:$true] %s42
      %48 = dma.hbm_to_vmem [thread:$0]  %s41, 7680, %s43, [#allocation5], 128, 128, 8
    $region13: #{tpu_custom_call.1} parent=1 // pred_fallthru
      _
    // Predicated region
    $region14: #{tpu_custom_call.1} parent=1 // pred_check
      _
    $region15: #{tpu_custom_call.1} parent=1 // pred_check_branch
      %50 = sbr.rel (0) target = $region17
    $region16: #{tpu_custom_call.1} parent=1 // pred_region
      %52 = vsyncadd [#allocation8], 0
      %s53 = sshll.u32 %s3, 4
      %s54 = int_to_ptr.hbm [resolvable:$true] %s53
      %s55 = sshll.u32 [#allocation7], 4
      %s56 = int_to_ptr.vmem [resolvable:$true] %s55
      %61 = dma.hbm_to_vmem [thread:$0]  %s54, 256, %s56, [#allocation8], 128, 128, 8
    $region17: #{tpu_custom_call.1} parent=1 // pred_fallthru
      _
    // Predicated region
    $region18: #{tpu_custom_call.1} parent=1 // pred_check
      _
    $region19: #{tpu_custom_call.1} parent=1 // pred_check_branch
      %63 = sbr.rel (0) target = $region21
    $region20: #{tpu_custom_call.1} parent=1 // pred_region
      %65 = dma.done [#allocation3], 128
    $region21: #{tpu_custom_call.1} parent=1 // pred_fallthru
      _
    // Predicated region
    $region22: #{tpu_custom_call.1} parent=1 // pred_check
      _
    $region23: #{tpu_custom_call.1} parent=1 // pred_check_branch
      %67 = sbr.rel (0) target = $region25
    $region24: #{tpu_custom_call.1} parent=1 // pred_region
      %69 = dma.done [#allocation5], 16
    $region25: #{tpu_custom_call.1} parent=1 // pred_fallthru
      _
    // Predicated region
    $region26: #{tpu_custom_call.1} parent=1 // pred_check
      _
    $region27: #{tpu_custom_call.1} parent=1 // pred_check_branch
      %71 = sbr.rel (0) target = $region29
    $region28: #{tpu_custom_call.1} parent=1 // pred_region
      %73 = dma.done [#allocation5], 7680
    $region29: #{tpu_custom_call.1} parent=1 // pred_fallthru
      _
    // Predicated region
    $region30: #{tpu_custom_call.1} parent=1 // pred_check
      _
    $region31: #{tpu_custom_call.1} parent=1 // pred_check_branch
      %75 = sbr.rel (0) target = $region33
    $region32: #{tpu_custom_call.1} parent=1 // pred_region
      %77 = dma.done [#allocation8], 256
    $region33: #{tpu_custom_call.1} parent=1 // pred_fallthru
      _
    %v78 = vld [vmem:[#allocation2] sm:$0xf]
    %v79 = vld [vmem:[#allocation2 + $0x4] sm:$0xf]
    %v80 = vunpack.c.l.bf16 %v78
    %v81 = vunpack.c.l.bf16 %v79
    %v82 = vld [vmem:[#allocation4] sm:$0x1]
    %v84 = vperm.slane %v82, 0
    %v86 = vmul.f32 %v80, %v84
    %v87 = vmul.f32 %v81, %v84
    %v88 = vld [vmem:[#allocation6] sm:$0xff]
    %v89 = vld [vmem:[#allocation6 + $0x8] sm:$0xff]
    %v90 = vld [vmem:[#allocation6 + $0x10] sm:$0xff]
    %v91 = vld [vmem:[#allocation6 + $0x18] sm:$0xff]
    %v92 = vld [vmem:[#allocation6 + $0x20] sm:$0xff]
    %v93 = vld [vmem:[#allocation6 + $0x28] sm:$0xff]
    %v94 = vld [vmem:[#allocation6 + $0x30] sm:$0xff]
    %v95 = vld [vmem:[#allocation6 + $0x38] sm:$0xff]
    %v96 = vld [vmem:[#allocation6 + $0x40] sm:$0xff]
    %v97 = vld [vmem:[#allocation6 + $0x48] sm:$0xff]
    %v98 = vld [vmem:[#allocation6 + $0x50] sm:$0xff]
    %v99 = vld [vmem:[#allocation6 + $0x58] sm:$0xff]
    %v100 = vld [vmem:[#allocation6 + $0x60] sm:$0xff]
    %v101 = vld [vmem:[#allocation6 + $0x68] sm:$0xff]
    %v102 = vld [vmem:[#allocation6 + $0x70] sm:$0xff]
    %v103 = vld [vmem:[#allocation6 + $0x78] sm:$0xff]
    %v104 = vld [vmem:[#allocation6 + $0x80] sm:$0xff]
    %v105 = vld [vmem:[#allocation6 + $0x88] sm:$0xff]
    %v106 = vld [vmem:[#allocation6 + $0x90] sm:$0xff]
    %v107 = vld [vmem:[#allocation6 + $0x98] sm:$0xff]
    %v108 = vld [vmem:[#allocation6 + $0xa0] sm:$0xff]
    %v109 = vld [vmem:[#allocation6 + $0xa8] sm:$0xff]
    %v110 = vld [vmem:[#allocation6 + $0xb0] sm:$0xff]
    %v111 = vld [vmem:[#allocation6 + $0xb8] sm:$0xff]
    %v112 = vld [vmem:[#allocation7] sm:$0x1]
    %v113 = vld [vmem:[#allocation7 + $0x1] sm:$0x1]
    %v114 = vperm.slane %v112, 0
    %115 = vmatpush.msra.mxu0 %v103
    %116 = vmatpush.msra.mxu0 %v102
    %117 = vmatpush.msra.mxu0 %v101
    %118 = vmatpush.msra.mxu0 %v100
    %119 = vmatpush.msra.mxu0 %v99
    %120 = vmatpush.msra.mxu0 %v98
    %121 = vmatpush.msra.mxu0 %v97
    %122 = vmatpush.msra.mxu0 %v96
    %123 = vmatpush.msra.mxu0 %v95
    %124 = vmatpush.msra.mxu0 %v94
    %125 = vmatpush.msra.mxu0 %v93
    %126 = vmatpush.msra.mxu0 %v92
    %127 = vmatpush.msra.mxu0 %v91
    %128 = vmatpush.msra.mxu0 %v90
    %129 = vmatpush.msra.mxu0 %v89
    %130 = vmatpush.msra.mxu0 %v88
    %131 = vmatmul.f32.gmra.mxu0 %v86
    %v132 = vpop.f32.mrf.mxu0
    %v133 = vadd.f32 %v114, %v132
    %134 = vmatmul.f32.gmra.mxu0 %v87
    %v135 = vpop.f32.mrf.mxu0
    %v136 = vadd.f32 %v114, %v135
    %137 = vdwg.mxu0
    %v138 = vmax.f32 %v133, 0.0
    %v139 = vmax.f32 %v136, 0.0
    %v140 = vperm.slane %v113, 0
    %vm141 = vcmask 523264
    %v143 = vsel %vm141, %v138, 0
    %v146 = vsel %vm141, %v139, 0
    %148 = vmatpush.msra.mxu0 0.0
    %149 = vmatpush.msra.mxu0 0.0
    %150 = vmatpush.msra.mxu0 0.0
    %151 = vmatpush.msra.mxu0 0.0
    %152 = vmatpush.msra.mxu0 0.0
    %153 = vmatpush.msra.mxu0 0.0
    %154 = vmatpush.msra.mxu0 0.0
    %155 = vmatpush.msra.mxu0 0.0
    %156 = vmatpush.msra.mxu0 %v111
    %157 = vmatpush.msra.mxu0 %v110
    %158 = vmatpush.msra.mxu0 %v109
    %159 = vmatpush.msra.mxu0 %v108
    %160 = vmatpush.msra.mxu0 %v107
    %161 = vmatpush.msra.mxu0 %v106
    %162 = vmatpush.msra.mxu0 %v105
    %163 = vmatpush.msra.mxu0 %v104
    %164 = vmatmul.f32.gmra.mxu0 %v143
    %v165 = vpop.f32.mrf.mxu0
    %v166 = vadd.f32 %v140, %v165
    %167 = vmatmul.f32.gmra.mxu0 %v146
    %v168 = vpop.f32.mrf.mxu0
    %v169 = vadd.f32 %v140, %v168
    %170 = vdwg.mxu0
    %v171 = vmax.f32 %v166, 0.0
    %v172 = vmax.f32 %v169, 0.0
    %v173 = vld [vmem:[#allocation7 + $0x2] sm:$0x1]
    %v174 = vld [vmem:[#allocation6 + $0x1c0] sm:$0xff]
    %v175 = vld [vmem:[#allocation6 + $0x1c8] sm:$0xff]
    %v176 = vld [vmem:[#allocation6 + $0x1d0] sm:$0xff]
    %v177 = vld [vmem:[#allocation6 + $0x1d8] sm:$0xff]
    %v178 = vperm.slane %v173, 0
    %v179 = vmul.f32 %v171, %v178
    %v180 = vmul.f32 %v172, %v178
    %v181 = vld [vmem:[#allocation6 + $0xc0] sm:$0xff]
    %v182 = vld [vmem:[#allocation6 + $0xc8] sm:$0xff]
    %v183 = vld [vmem:[#allocation6 + $0xd0] sm:$0xff]
    %v184 = vld [vmem:[#allocation6 + $0xd8] sm:$0xff]
    %v185 = vld [vmem:[#allocation6 + $0xe0] sm:$0xff]
    %v186 = vld [vmem:[#allocation6 + $0xe8] sm:$0xff]
    %v187 = vld [vmem:[#allocation6 + $0xf0] sm:$0xff]
    %v188 = vld [vmem:[#allocation6 + $0xf8] sm:$0xff]
    %v189 = vld [vmem:[#allocation6 + $0x100] sm:$0xff]
    %v190 = vld [vmem:[#allocation6 + $0x108] sm:$0xff]
    %v191 = vld [vmem:[#allocation6 + $0x110] sm:$0xff]
    %v192 = vld [vmem:[#allocation6 + $0x118] sm:$0xff]
    %v193 = vld [vmem:[#allocation6 + $0x120] sm:$0xff]
    %v194 = vld [vmem:[#allocation6 + $0x128] sm:$0xff]
    %v195 = vld [vmem:[#allocation6 + $0x130] sm:$0xff]
    %v196 = vld [vmem:[#allocation6 + $0x138] sm:$0xff]
    %v197 = vld [vmem:[#allocation7 + $0x5] sm:$0x1]
    %v198 = vld [vmem:[#allocation7 + $0x7] sm:$0x1]
    %v199 = vperm.slane %v197, 0
    %v200 = vmul.f32 %v86, %v199
    %v201 = vmul.f32 %v87, %v199
    %202 = vmatpush.msra.mxu0 %v196
    %203 = vmatpush.msra.mxu0 %v195
    %204 = vmatpush.msra.mxu0 %v194
    %205 = vmatpush.msra.mxu0 %v193
    %206 = vmatpush.msra.mxu0 %v192
    %207 = vmatpush.msra.mxu0 %v191
    %208 = vmatpush.msra.mxu0 %v190
    %209 = vmatpush.msra.mxu0 %v189
    %210 = vmatpush.msra.mxu0 %v188
    %211 = vmatpush.msra.mxu0 %v187
    %212 = vmatpush.msra.mxu0 %v186
    %213 = vmatpush.msra.mxu0 %v185
    %214 = vmatpush.msra.mxu0 %v184
    %215 = vmatpush.msra.mxu0 %v183
    %216 = vmatpush.msra.mxu0 %v182
    %217 = vmatpush.msra.mxu0 %v181
    %218 = vmatmul.f32.gmra.mxu0 %v200
    %v219 = vpop.f32.mrf.mxu0
    %v220 = vadd.f32 0.0, %v219
    %221 = vmatmul.f32.gmra.mxu0 %v201
    %v222 = vpop.f32.mrf.mxu0
    %v223 = vadd.f32 0.0, %v222
    %224 = vdwg.mxu0
    %v225 = vmul.f32 %v86, %v220
    %v226 = vmul.f32 %v87, %v223
    %v227 = vperm.slane %v198, 0
    %v228 = vadd.f32 %v225, %v227
    %v229 = vadd.f32 %v226, %v227
    %v230 = vadd.f32 %v228, %v86
    %v231 = vadd.f32 %v229, %v87
    %v232 = vld [vmem:[#allocation7 + $0x6] sm:$0x1]
    %v233 = vld [vmem:[#allocation7 + $0x8] sm:$0x1]
    %v234 = vperm.slane %v232, 0
    %v235 = vmul.f32 %v230, %v234
    %v236 = vmul.f32 %v231, %v234
    %237 = vmatpush.msra.mxu0 %v196
    %238 = vmatpush.msra.mxu0 %v195
    %239 = vmatpush.msra.mxu0 %v194
    %240 = vmatpush.msra.mxu0 %v193
    %241 = vmatpush.msra.mxu0 %v192
    %242 = vmatpush.msra.mxu0 %v191
    %243 = vmatpush.msra.mxu0 %v190
    %244 = vmatpush.msra.mxu0 %v189
    %245 = vmatpush.msra.mxu0 %v188
    %246 = vmatpush.msra.mxu0 %v187
    %247 = vmatpush.msra.mxu0 %v186
    %248 = vmatpush.msra.mxu0 %v185
    %249 = vmatpush.msra.mxu0 %v184
    %250 = vmatpush.msra.mxu0 %v183
    %251 = vmatpush.msra.mxu0 %v182
    %252 = vmatpush.msra.mxu0 %v181
    %253 = vmatmul.f32.gmra.mxu0 %v235
    %v254 = vpop.f32.mrf.mxu0
    %v255 = vadd.f32 0.0, %v254
    %256 = vmatmul.f32.gmra.mxu0 %v236
    %v257 = vpop.f32.mrf.mxu0
    %v258 = vadd.f32 0.0, %v257
    %259 = vdwg.mxu0
    %v260 = vmul.f32 %v86, %v255
    %v261 = vmul.f32 %v87, %v258
    %v262 = vperm.slane %v233, 0
    %v263 = vadd.f32 %v260, %v262
    %v264 = vadd.f32 %v261, %v262
    %v265 = vadd.f32 %v263, %v230
    %v266 = vadd.f32 %v264, %v231
    %v267 = vld [vmem:[#allocation7 + $0x3] sm:$0x1]
    %v268 = vld [vmem:[#allocation6 + $0x140] sm:$0xff]
    %v269 = vld [vmem:[#allocation6 + $0x148] sm:$0xff]
    %v270 = vld [vmem:[#allocation6 + $0x150] sm:$0xff]
    %v271 = vld [vmem:[#allocation6 + $0x158] sm:$0xff]
    %v272 = vld [vmem:[#allocation6 + $0x160] sm:$0xff]
    %v273 = vld [vmem:[#allocation6 + $0x168] sm:$0xff]
    %v274 = vld [vmem:[#allocation6 + $0x170] sm:$0xff]
    %v275 = vld [vmem:[#allocation6 + $0x178] sm:$0xff]
    %v276 = vld [vmem:[#allocation6 + $0x180] sm:$0xff]
    %v277 = vld [vmem:[#allocation6 + $0x188] sm:$0xff]
    %v278 = vld [vmem:[#allocation6 + $0x190] sm:$0xff]
    %v279 = vld [vmem:[#allocation6 + $0x198] sm:$0xff]
    %v280 = vld [vmem:[#allocation6 + $0x1a0] sm:$0xff]
    %v281 = vld [vmem:[#allocation6 + $0x1a8] sm:$0xff]
    %v282 = vld [vmem:[#allocation6 + $0x1b0] sm:$0xff]
    %v283 = vld [vmem:[#allocation6 + $0x1b8] sm:$0xff]
    %v284 = vperm.slane %v267, 0
    %v285 = vmul.f32 %v265, %v284
    %v286 = vmul.f32 %v266, %v284
    %287 = vmatpush.msra.mxu0 %v283
    %288 = vmatpush.msra.mxu0 %v282
    %289 = vmatpush.msra.mxu0 %v281
    %290 = vmatpush.msra.mxu0 %v280
    %291 = vmatpush.msra.mxu0 %v279
    %292 = vmatpush.msra.mxu0 %v278
    %293 = vmatpush.msra.mxu0 %v277
    %294 = vmatpush.msra.mxu0 %v276
    %295 = vmatpush.msra.mxu0 %v275
    %296 = vmatpush.msra.mxu0 %v274
    %297 = vmatpush.msra.mxu0 %v273
    %298 = vmatpush.msra.mxu0 %v272
    %299 = vmatpush.msra.mxu0 %v271
    %300 = vmatpush.msra.mxu0 %v270
    %301 = vmatpush.msra.mxu0 %v269
    %302 = vmatpush.msra.mxu0 %v268
    %303 = vmatmul.f32.gmra.mxu0 %v285
    %v304 = vpop.f32.mrf.mxu0
    %v305 = vadd.f32 0.0, %v304
    %306 = vmatmul.f32.gmra.mxu0 %v286
    %v307 = vpop.f32.mrf.mxu0
    %v308 = vadd.f32 0.0, %v307
    %309 = vdwg.mxu0
    %vm310 = vcmask 261120
    %v312 = vsel %vm310, %v179, 0
    %v315 = vsel %vm310, %v180, 0
    %317 = vmatpush.msra.mxu0 0.0
    %318 = vmatpush.msra.mxu0 0.0
    %319 = vmatpush.msra.mxu0 0.0
    %320 = vmatpush.msra.mxu0 0.0
    %321 = vmatpush.msra.mxu0 0.0
    %322 = vmatpush.msra.mxu0 0.0
    %323 = vmatpush.msra.mxu0 0.0
    %324 = vmatpush.msra.mxu0 0.0
    %325 = vmatpush.msra.mxu0 0.0
    %326 = vmatpush.msra.mxu0 0.0
    %327 = vmatpush.msra.mxu0 0.0
    %328 = vmatpush.msra.mxu0 0.0
    %329 = vmatpush.msra.mxu0 %v177
    %330 = vmatpush.msra.mxu0 %v176
    %331 = vmatpush.msra.mxu0 %v175
    %332 = vmatpush.msra.mxu0 %v174
    %333 = vmatmul.f32.gmra.mxu0 %v312
    %v334 = vpop.f32.mrf.mxu0
    %v335 = vadd.f32 %v305, %v334
    %336 = vmatmul.f32.gmra.mxu0 %v315
    %v337 = vpop.f32.mrf.mxu0
    %v338 = vadd.f32 %v308, %v337
    %339 = vdwg.mxu0
    %v340 = vld [vmem:[#allocation7 + $0x4] sm:$0x1]
    %v341 = vperm.slane %v340, 0
    %v342 = vadd.f32 %v335, %v341
    %v343 = vadd.f32 %v338, %v341
    %vm344 = vcmask 31744
    %345 = vst.msk [vmem:[%s4] sm:$0xff] %vm344, %v342
    %346 = vst.msk [vmem:[%s4 + $0x8] sm:$0xff] %vm344, %v343
    // Predicated region
    $region34: #{tpu_custom_call.1} parent=1 // pred_check
      _
    $region35: #{tpu_custom_call.1} parent=1 // pred_check_branch
      %348 = sbr.rel (0) target = $region37
    $region36: #{tpu_custom_call.1} parent=1 // pred_region
      _
    $region37: #{tpu_custom_call.1} parent=1 // pred_fallthru
      _
    // Predicated region
    $region38: #{tpu_custom_call.1} parent=1 // pred_check
      _
    $region39: #{tpu_custom_call.1} parent=1 // pred_check_branch
      %350 = sbr.rel (0) target = $region41
    $region40: #{tpu_custom_call.1} parent=1 // pred_region
      _
    $region41: #{tpu_custom_call.1} parent=1 // pred_fallthru
      _
    %351 = vsyncpa [#allocation3], 1
    %352 = vsyncpa [#allocation5], 1
    %353 = vsyncpa [#allocation8], 1

</llo_original>
